<compile_context>
chip_gen: v7x
topology: tpu7x:2x2x1
jax: 0.10.0
libtpu: 0.0.40
codegen_flags: <defaults>
</compile_context>

<pallas_src>
import math

import jax
import jax.numpy as jnp
from jax.experimental import pallas as pl
from jax.experimental.pallas import tpu as pltpu


def _make_dma_concat_kernel(channels):
    """Kernel that DMA-copies each HBM input into its channel slice of the HBM output."""
    offsets = []
    off = 0
    for c in channels:
        offsets.append(off)
        off += c

    def kernel(*refs):
        # refs = (*in_hbm_refs, out_hbm_ref, sem_ref)
        sem = refs[-1]
        out_ref = refs[-2]
        in_refs = refs[:-2]

        copies = []
        for i, (x_ref, o, c) in enumerate(zip(in_refs, offsets, channels)):
            # Strided HBM->HBM DMA: (outer, c, tail) -> (outer, c, tail) slice of
            # the (outer, sum_c, tail) output.  No VMEM staging, no vector work.
            cp = pltpu.make_async_copy(x_ref, out_ref.at[:, o:o + c, :], sem.at[i])
            cp.start()
            copies.append(cp)
        # All copies issued (so the DMA engines work in parallel); now wait.
        for cp in copies:
            cp.wait()

    return kernel


def concat_pallas(xs, dimension=1):
    """JAX/Pallas equivalent of torch.cat(xs, dim=dimension)."""
    xs = list(xs)
    if len(xs) == 1:
        # Pass-through: no copy kernel needed at all.
        return xs[0]

    nd = xs[0].ndim
    d = dimension % nd
    dtype = jnp.result_type(*xs)
    # DMA engines cannot cast; pre-cast only mismatched inputs (rare for Concat).
    xs = [x if x.dtype == dtype else x.astype(dtype) for x in xs]

    base = xs[0].shape
    for x in xs:
        assert x.ndim == nd, "all inputs must have the same rank"
        assert x.shape[:d] == base[:d] and x.shape[d + 1:] == base[d + 1:], (
            "all inputs must match on every dim except the concat dim")

    outer = int(math.prod(base[:d]))
    tail = int(math.prod(base[d + 1:]))
    channels = [int(x.shape[d]) for x in xs]
    sum_c = sum(channels)
    out_shape = base[:d] + (sum_c,) + base[d + 1:]

    # 3-D views: (outer, C_i, tail). Row-major reshape is layout-preserving (no copy).
    xs3 = [x.reshape(outer, c, tail) for x, c in zip(xs, channels)]

    itemsize = jnp.dtype(dtype).itemsize
    out_bytes = outer * sum_c * tail * itemsize

    out3 = pl.pallas_call(
        _make_dma_concat_kernel(channels),
        out_shape=jax.ShapeDtypeStruct((outer, sum_c, tail), dtype),
        # Pure HBM->HBM DMA path: leave everything in place, no auto-pipelining.
        in_specs=[pl.BlockSpec(memory_space=pl.ANY) for _ in xs3],
        out_specs=pl.BlockSpec(memory_space=pl.ANY),
        scratch_shapes=[pltpu.SemaphoreType.DMA((len(xs3),))],
        # Memory-bound copy: read once + write once.
        cost_estimate=pl.CostEstimate(
            flops=0, transcendentals=0, bytes_accessed=2 * out_bytes),
    )(*xs3)

    return out3.reshape(out_shape)


class Concat:
    """JAX/Pallas equivalent of ultralytics Concat: torch.cat(x, self.d)."""

    def __init__(self, dimension=1):
        self.d = dimension

    def __call__(self, x):
        return concat_pallas(x, self.d)


if __name__ == "__main__":
    key = jax.random.PRNGKey(0)
    k0, k1, k2, k3, k4 = jax.random.split(key, 5)

    # ---- Test 1: typical YOLO usage — NCHW feature maps, concat dim = 1 ----
    x_list = [
        jax.random.normal(k0, (2, 8, 16, 16), dtype=jnp.float32),
        jax.random.normal(k1, (2, 16, 16, 16), dtype=jnp.float32),
        jax.random.normal(k2, (2, 8, 16, 16), dtype=jnp.float32),
    ]
    mod = Concat(dimension=1)
    out = jax.block_until_ready(mod(x_list))
    ref = jnp.concatenate(x_list, axis=1)
    assert out.shape == ref.shape, (out.shape, ref.shape)
    assert out.dtype == ref.dtype, (out.dtype, ref.dtype)
    assert bool(jnp.array_equal(out, ref))

    # ---- Test 2: mixed dtypes + small non-128-divisible tail ----
    y_list = [
        jax.random.normal(k3, (1, 8, 8, 8), dtype=jnp.bfloat16),
        jax.random.normal(k4, (1, 8, 8, 8), dtype=jnp.float32),
    ]
    out2 = jax.block_until_ready(Concat(dimension=1)(y_list))
    ref2 = jnp.concatenate(y_list, axis=1)
    assert out2.shape == ref2.shape and out2.dtype == ref2.dtype
    assert bool(jnp.array_equal(out2, ref2))

    # ---- Test 3: single-tensor pass-through ----
    out3 = jax.block_until_ready(Concat(dimension=1)([x_list[0]]))
    assert bool(jnp.array_equal(out3, x_list[0]))

    print("KERNEL_OK")
</pallas_src>

<mosaic_0001>
module attributes {stable_mosaic.version = 11 : i64} {
  func.func @kernel(%arg0: memref<2x8x256xf32, #tpu.memory_space<any>>, %arg1: memref<2x16x256xf32, #tpu.memory_space<any>>, %arg2: memref<2x8x256xf32, #tpu.memory_space<any>>, %arg3: memref<2x32x256xf32, #tpu.memory_space<any>>, %arg4: memref<3x!tpu.dma_semaphore, #tpu.memory_space<semaphore_mem>>) attributes {dimension_semantics = [], scalar_prefetch = 0 : i64, scratch_operands = 1 : i64, tpu.core_type = #tpu.core_type<tc>} {
    %c0_i32 = arith.constant 0 : i32
    %c0_i32_0 = arith.constant 0 : i32
    %c0_i32_1 = arith.constant 0 : i32
    %c0_i32_2 = arith.constant 0 : i32
    %0 = tpu.memref_slice %arg3[%c0_i32_0, %c0_i32_1, %c0_i32_2] : memref<2x32x256xf32, #tpu.memory_space<any>> -> memref<2x8x256xf32, #tpu.memory_space<any>>
    %1 = tpu.memref_slice %arg4[%c0_i32] : memref<3x!tpu.dma_semaphore, #tpu.memory_space<semaphore_mem>> -> memref<1x!tpu.dma_semaphore, #tpu.memory_space<semaphore_mem>>
    %2 = tpu.memref_squeeze %1 : memref<1x!tpu.dma_semaphore, #tpu.memory_space<semaphore_mem>> -> memref<!tpu.dma_semaphore, #tpu.memory_space<semaphore_mem>>
    tpu.enqueue_dma source(%arg0 : memref<2x8x256xf32, #tpu.memory_space<any>>) target(%0 : memref<2x8x256xf32, #tpu.memory_space<any>>) target_semaphore(%2 : memref<!tpu.dma_semaphore, #tpu.memory_space<semaphore_mem>>)
    %c1_i32 = arith.constant 1 : i32
    %c0_i32_3 = arith.constant 0 : i32
    %c8_i32 = arith.constant 8 : i32
    %c0_i32_4 = arith.constant 0 : i32
    %3 = tpu.memref_slice %arg3[%c0_i32_3, %c8_i32, %c0_i32_4] : memref<2x32x256xf32, #tpu.memory_space<any>> -> memref<2x16x256xf32, #tpu.memory_space<any>>
    %4 = tpu.memref_slice %arg4[%c1_i32] : memref<3x!tpu.dma_semaphore, #tpu.memory_space<semaphore_mem>> -> memref<1x!tpu.dma_semaphore, #tpu.memory_space<semaphore_mem>>
    %5 = tpu.memref_squeeze %4 : memref<1x!tpu.dma_semaphore, #tpu.memory_space<semaphore_mem>> -> memref<!tpu.dma_semaphore, #tpu.memory_space<semaphore_mem>>
    tpu.enqueue_dma source(%arg1 : memref<2x16x256xf32, #tpu.memory_space<any>>) target(%3 : memref<2x16x256xf32, #tpu.memory_space<any>>) target_semaphore(%5 : memref<!tpu.dma_semaphore, #tpu.memory_space<semaphore_mem>>)
    %c2_i32 = arith.constant 2 : i32
    %c0_i32_5 = arith.constant 0 : i32
    %c24_i32 = arith.constant 24 : i32
    %c0_i32_6 = arith.constant 0 : i32
    %6 = tpu.memref_slice %arg3[%c0_i32_5, %c24_i32, %c0_i32_6] : memref<2x32x256xf32, #tpu.memory_space<any>> -> memref<2x8x256xf32, #tpu.memory_space<any>>
    %7 = tpu.memref_slice %arg4[%c2_i32] : memref<3x!tpu.dma_semaphore, #tpu.memory_space<semaphore_mem>> -> memref<1x!tpu.dma_semaphore, #tpu.memory_space<semaphore_mem>>
    %8 = tpu.memref_squeeze %7 : memref<1x!tpu.dma_semaphore, #tpu.memory_space<semaphore_mem>> -> memref<!tpu.dma_semaphore, #tpu.memory_space<semaphore_mem>>
    tpu.enqueue_dma source(%arg2 : memref<2x8x256xf32, #tpu.memory_space<any>>) target(%6 : memref<2x8x256xf32, #tpu.memory_space<any>>) target_semaphore(%8 : memref<!tpu.dma_semaphore, #tpu.memory_space<semaphore_mem>>)
    %c0_i32_7 = arith.constant 0 : i32
    %c0_i32_8 = arith.constant 0 : i32
    %c0_i32_9 = arith.constant 0 : i32
    %c0_i32_10 = arith.constant 0 : i32
    %9 = tpu.memref_slice %arg3[%c0_i32_8, %c0_i32_9, %c0_i32_10] : memref<2x32x256xf32, #tpu.memory_space<any>> -> memref<2x8x256xf32, #tpu.memory_space<any>>
    %10 = tpu.memref_slice %arg4[%c0_i32_7] : memref<3x!tpu.dma_semaphore, #tpu.memory_space<semaphore_mem>> -> memref<1x!tpu.dma_semaphore, #tpu.memory_space<semaphore_mem>>
    %11 = tpu.memref_squeeze %10 : memref<1x!tpu.dma_semaphore, #tpu.memory_space<semaphore_mem>> -> memref<!tpu.dma_semaphore, #tpu.memory_space<semaphore_mem>>
    tpu.wait_dma2 semaphore(%11 : memref<!tpu.dma_semaphore, #tpu.memory_space<semaphore_mem>>) src(%arg0 : memref<2x8x256xf32, #tpu.memory_space<any>>) dst(%9 : memref<2x8x256xf32, #tpu.memory_space<any>>)
    %c1_i32_11 = arith.constant 1 : i32
    %c0_i32_12 = arith.constant 0 : i32
    %c8_i32_13 = arith.constant 8 : i32
    %c0_i32_14 = arith.constant 0 : i32
    %12 = tpu.memref_slice %arg3[%c0_i32_12, %c8_i32_13, %c0_i32_14] : memref<2x32x256xf32, #tpu.memory_space<any>> -> memref<2x16x256xf32, #tpu.memory_space<any>>
    %13 = tpu.memref_slice %arg4[%c1_i32_11] : memref<3x!tpu.dma_semaphore, #tpu.memory_space<semaphore_mem>> -> memref<1x!tpu.dma_semaphore, #tpu.memory_space<semaphore_mem>>
    %14 = tpu.memref_squeeze %13 : memref<1x!tpu.dma_semaphore, #tpu.memory_space<semaphore_mem>> -> memref<!tpu.dma_semaphore, #tpu.memory_space<semaphore_mem>>
    tpu.wait_dma2 semaphore(%14 : memref<!tpu.dma_semaphore, #tpu.memory_space<semaphore_mem>>) src(%arg1 : memref<2x16x256xf32, #tpu.memory_space<any>>) dst(%12 : memref<2x16x256xf32, #tpu.memory_space<any>>)
    %c2_i32_15 = arith.constant 2 : i32
    %c0_i32_16 = arith.constant 0 : i32
    %c24_i32_17 = arith.constant 24 : i32
    %c0_i32_18 = arith.constant 0 : i32
    %15 = tpu.memref_slice %arg3[%c0_i32_16, %c24_i32_17, %c0_i32_18] : memref<2x32x256xf32, #tpu.memory_space<any>> -> memref<2x8x256xf32, #tpu.memory_space<any>>
    %16 = tpu.memref_slice %arg4[%c2_i32_15] : memref<3x!tpu.dma_semaphore, #tpu.memory_space<semaphore_mem>> -> memref<1x!tpu.dma_semaphore, #tpu.memory_space<semaphore_mem>>
    %17 = tpu.memref_squeeze %16 : memref<1x!tpu.dma_semaphore, #tpu.memory_space<semaphore_mem>> -> memref<!tpu.dma_semaphore, #tpu.memory_space<semaphore_mem>>
    tpu.wait_dma2 semaphore(%17 : memref<!tpu.dma_semaphore, #tpu.memory_space<semaphore_mem>>) src(%arg2 : memref<2x8x256xf32, #tpu.memory_space<any>>) dst(%15 : memref<2x8x256xf32, #tpu.memory_space<any>>)
    return
  }
}

</mosaic_0001>

<llo_original>
// kernel: tpu_custom_call.1
$region0: #{tpu_custom_call.1}
  #allocation0 [shape = 'u32[]', space=smem, size = 0x4, offset = 0x4, fixed_abs, tag = 'smem constant byte address 0x4 - core index']
  #allocation1 [shape = 'u32[144,128]{1,0:T(1,128)}', space=vmem, size = 0x12000, scoped, tag = 'internal scratch']
  #allocation2 [shape = 's32[3]{0}', space=sflag, size = 0xc, scoped, tag = 'scratch operand']
  #allocation3 [shape = 's32[]', space=sflag, size = 0x4, offset = 0, fixed_abs, tag = 'sflag constant byte address 0x0 - dummy sync flag']
  #allocation5 [shape = 's32[]', space=sflag, size = 0x4, offset = 0, fixed_abs, tag = 'sflag constant byte address 0x0 - dummy sync flag']
  #allocation7 [shape = 's32[]', space=sflag, size = 0x4, offset = 0, fixed_abs, tag = 'sflag constant byte address 0x0 - dummy sync flag']
  %s0 = inlined_call_operand.hbm [shape: f32[2,8,256], index: 0, kind: input, shape index: {}]
  %s1 = inlined_call_operand.hbm [shape: f32[2,16,256], index: 1, kind: input, shape index: {}]
  %s2 = inlined_call_operand.hbm [shape: f32[2,8,256], index: 2, kind: input, shape index: {}]
  %s3 = inlined_call_operand.hbm [shape: f32[2,32,256], index: 3, kind: output, shape index: {}]
  %s4 = sld [smem:[#allocation0]]
  $region2: #{tpu_custom_call.1} parent=0
    _
  %s6 = ssub.s32 1, %s4
  %s7 = scalar_select 0, %s6, %s4
  $region1: #{tpu_custom_call.1} parent=0
    #allocation4 [shape = 'u32[3]{0}', space=smem, size = 0xc, scoped, tag = 'DMA stride descriptor']
    #allocation6 [shape = 'u32[3]{0}', space=smem, size = 0xc, scoped, tag = 'DMA stride descriptor']
    #allocation8 [shape = 'u32[3]{0}', space=smem, size = 0xc, scoped, tag = 'DMA stride descriptor']
    %s9 = sshll.u32 1, 14
    %s10 = sxor.u32 4294967295, %s9
    %s13 = sshll.u32 3, 24
    %s14 = sxor.u32 4294967295, %s13
    %s15 = sand.u32 0, %s14
    %s17 = sor.u32 %s15, 0
    %20 = sst [smem:[#allocation4]] 256
    %s21 = scalar_lea.smem [#allocation4], 1
    %22 = sst [smem:[%s21]] 1024
    %s23 = scalar_lea.smem [#allocation4], 2
    %24 = sst [smem:[%s23]] 16
    %26 = dma.general %s0, 512, %s3, [#allocation2], [#allocation3], [#allocation4], %s17, 0
    %s27 = scalar_lea.hbm %s3, 256
    %s28 = scalar_lea.sflag [#allocation2], 1
    %s30 = sshll.u32 1, 14
    %s31 = sxor.u32 4294967295, %s30
    %s34 = sshll.u32 3, 24
    %s35 = sxor.u32 4294967295, %s34
    %s36 = sand.u32 0, %s35
    %s38 = sor.u32 %s36, 0
    %41 = sst [smem:[#allocation6]] 512
    %s42 = scalar_lea.smem [#allocation6], 1
    %43 = sst [smem:[%s42]] 1024
    %s44 = scalar_lea.smem [#allocation6], 2
    %45 = sst [smem:[%s44]] 32
    %47 = dma.general %s1, 1024, %s27, %s28, [#allocation5], [#allocation6], %s38, 0
    %s48 = scalar_lea.hbm %s3, 768
    %s49 = scalar_lea.sflag [#allocation2], 2
    %s51 = sshll.u32 1, 14
    %s52 = sxor.u32 4294967295, %s51
    %s55 = sshll.u32 3, 24
    %s56 = sxor.u32 4294967295, %s55
    %s57 = sand.u32 0, %s56
    %s59 = sor.u32 %s57, 0
    %62 = sst [smem:[#allocation8]] 256
    %s63 = scalar_lea.smem [#allocation8], 1
    %64 = sst [smem:[%s63]] 1024
    %s65 = scalar_lea.smem [#allocation8], 2
    %66 = sst [smem:[%s65]] 16
    %68 = dma.general %s2, 512, %s48, %s49, [#allocation7], [#allocation8], %s59, 0
    %s69 = smul.u32 8, 2
    %s70 = smul.u32 %s69, 1
    %s71 = smul.u32 %s70, 2
    %s72 = sshll.u32 %s71, 4
    %73 = dma.done [#allocation2], %s72
    %s74 = smul.u32 %s69, 2
    %s75 = smul.u32 %s74, 2
    %s76 = sshll.u32 %s75, 4
    %77 = dma.done %s28, %s76
    %s78 = sshll.u32 %s71, 4
    %79 = dma.done %s49, %s78
  %80 = vsyncmov [#allocation2]
  %s81 = vpop.sfrf %80
  %p82 = scmp.eq.s32.totalorder %s81, 0
  %p83 = pneg %p82
  %85 = shalt.err (%p83)
  %s86 = scalar_lea.sflag [#allocation2], 1
  %87 = vsyncmov %s86
  %s88 = vpop.sfrf %87
  %p89 = scmp.eq.s32.totalorder %s88, 0
  %p90 = pneg %p89
  %92 = shalt.err (%p90)
  %s93 = scalar_lea.sflag [#allocation2], 2
  %94 = vsyncmov %s93
  %s95 = vpop.sfrf %94
  %p96 = scmp.eq.s32.totalorder %s95, 0
  %p97 = pneg %p96
  %99 = shalt.err (%p97)

</llo_original>
